<compile_context>
chip_gen: v5e
topology: v5e:2x2
jax: 0.10.0
libtpu: 0.0.40
codegen_flags: <defaults>
</compile_context>

<pallas_src>
import functools

import jax
import jax.numpy as jnp
from jax.experimental import pallas as pl
from jax.experimental.pallas import tpu as pltpu


def _round_up(x, m):
    return ((x + m - 1) // m) * m


# ----------------------------- Pallas kernel --------------------------------
def _policy_kernel(obs_ref, w_ref, b_ref, out_ref, *, s_pad, action_dim):
    obs = obs_ref[...]                                          # [TB, S_pad]

    # Fused layer 1 (actor layer1 | critic layer1): [TB, 256]
    z1 = jnp.dot(obs, w_ref[0:s_pad, :],
                 preferred_element_type=jnp.float32) + b_ref[0:1, :]
    h1 = jnp.maximum(z1, 0.0)

    # Fused layer 2 (block-diagonal: actor top-left, critic bottom-right): [TB, 256]
    z2 = jnp.dot(h1, w_ref[s_pad:s_pad + 256, :],
                 preferred_element_type=jnp.float32) + b_ref[1:2, :]
    h2 = jnp.maximum(z2, 0.0)

    # Fused heads (mean | log_std | value | zero-pad) -> lane-dense [TB, 128]
    z3 = (jnp.dot(h2, w_ref[s_pad + 256:s_pad + 512, 0:128],
                  preferred_element_type=jnp.float32) + b_ref[2:3, 0:128])

    # std = exp(clip(log_std, -20, 2)) only on columns [A, 2A)
    col = jax.lax.broadcasted_iota(jnp.int32, z3.shape, 1)
    is_std = (col >= action_dim) & (col < 2 * action_dim)
    std_vals = jnp.exp(jnp.clip(z3, -20.0, 2.0))
    out_ref[...] = jnp.where(is_std, std_vals, z3)


# ------------------------------ Forward wrapper ------------------------------
@functools.partial(jax.jit, static_argnums=(3, 4))
def _forward_impl(obs, wslab, bslab, action_dim, tb):
    B, S = obs.shape
    s_pad = wslab.shape[0] - 512
    A = action_dim

    # Pad the feature axis with zeros to match the packed weight rows (exact).
    if S < s_pad:
        obs = jnp.pad(obs, ((0, 0), (0, s_pad - S)))

    # Batch tiling: TB rows per grid step (weights stay resident in VMEM).
    tb_eff = min(tb, _round_up(B, 8))
    b_pad = _round_up(B, tb_eff)
    if b_pad > B:
        obs = jnp.pad(obs, ((0, b_pad - B), (0, 0)))
    grid = (b_pad // tb_eff,)

    kernel = functools.partial(_policy_kernel, s_pad=s_pad, action_dim=A)

    out = pl.pallas_call(
        kernel,
        out_shape=jax.ShapeDtypeStruct((b_pad, 128), jnp.float32),
        grid_spec=pltpu.PrefetchScalarGridSpec(
            num_scalar_prefetch=0,
            grid=grid,
            in_specs=[
                pl.BlockSpec((tb_eff, s_pad), lambda i: (i, 0)),   # obs tile
                pl.BlockSpec(wslab.shape, lambda i: (0, 0)),       # resident weights
                pl.BlockSpec(bslab.shape, lambda i: (0, 0)),       # resident biases
            ],
            out_specs=pl.BlockSpec((tb_eff, 128), lambda i: (i, 0)),
        ),
        compiler_params=pltpu.CompilerParams(
            dimension_semantics=("parallel",)),
        cost_estimate=pl.CostEstimate(
            flops=2 * b_pad * (s_pad * 256 + 256 * 256 + 256 * 128),
            transcendentals=b_pad * 128,
            bytes_accessed=4 * (b_pad * s_pad + wslab.size + bslab.size
                                + b_pad * 128),
        ),
    )(obs, wslab, bslab)

    mean = out[:B, 0:A]
    std = out[:B, A:2 * A]
    value = out[:B, 2 * A]          # critic(obs).flatten()
    return mean, std, value


def policy_net_forward(obs, wslab, bslab, *, action_dim, tb=512):
    """Returns ((mean, std), value) with value flattened to [B]."""
    mean, std, value = _forward_impl(obs, wslab, bslab, action_dim, tb)
    return (mean, std), value


# --------------------------- Parameter init ----------------------------------
def _orthogonal(key, out_dim, in_dim, gain):
    """Mimics torch.nn.init.orthogonal_ on a [out, in] weight."""
    rows, cols = out_dim, in_dim
    a = jax.random.normal(key, (max(rows, cols), min(rows, cols)), jnp.float32)
    q, r = jnp.linalg.qr(a)
    q = q * jnp.sign(jnp.diag(r))          # make the decomposition unique
    if rows < cols:
        q = q.T
    return gain * q                         # shape [out, in]


def init_policy_params(key, state_dim, action_dim):
    """Orthogonal(gain=sqrt(2)) weights, zero biases — matches _init_weights."""
    gain = jnp.sqrt(2.0)
    keys = jax.random.split(key, 7)

    def layer(k, in_dim, out_dim):
        w = _orthogonal(k, out_dim, in_dim, gain)          # torch layout [out, in]
        return w.T.astype(jnp.float32), jnp.zeros((1, out_dim), jnp.float32)

    params = {}
    # Actor
    params["w1"], params["b1"] = layer(keys[0], state_dim, 128)
    params["w2"], params["b2"] = layer(keys[1], 128, 128)
    params["wm"], params["bm"] = layer(keys[2], 128, action_dim)
    params["ws"], params["bs"] = layer(keys[3], 128, action_dim)
    # Critic
    params["wc1"], params["bc1"] = layer(keys[4], state_dim, 128)
    params["wc2"], params["bc2"] = layer(keys[5], 128, 128)
    params["wc3"], params["bc3"] = layer(keys[6], 128, 1)
    return params


def pack_params(params, state_dim, action_dim):
    """Pack the 14 tensors into one weight slab and one bias slab.

    weight slab  [S_pad + 512, 256]:
        rows [0,       S_pad)        : [ w1 | wc1 ]               (obs layer)
        rows [S_pad,   S_pad + 256)  : block-diag(w2, wc2)        (hidden layer)
        rows [S_pad+256, S_pad+512)  : heads -> cols [0,A)=wm, [A,2A)=ws,
                                       col 2A = wc3 (from critic half), rest 0
    bias slab [3, 256]: rows = fused biases of the three stages.
    """
    S, A = state_dim, action_dim
    assert 2 * A + 1 <= 128, "fused head slab supports action_dim <= 63"
    s_pad = _round_up(S, 8)
    f32 = jnp.float32

    w1f = jnp.zeros((s_pad, 256), f32)
    w1f = w1f.at[:S, :128].set(params["w1"])
    w1f = w1f.at[:S, 128:].set(params["wc1"])

    w2f = jnp.zeros((256, 256), f32)
    w2f = w2f.at[:128, :128].set(params["w2"])
    w2f = w2f.at[128:, 128:].set(params["wc2"])

    whf = jnp.zeros((256, 256), f32)
    whf = whf.at[:128, 0:A].set(params["wm"])
    whf = whf.at[:128, A:2 * A].set(params["ws"])
    whf = whf.at[128:, 2 * A:2 * A + 1].set(params["wc3"])

    wslab = jnp.concatenate([w1f, w2f, whf], axis=0)        # [S_pad+512, 256]

    b1f = jnp.concatenate([params["b1"], params["bc1"]], axis=1)   # [1, 256]
    b2f = jnp.concatenate([params["b2"], params["bc2"]], axis=1)   # [1, 256]
    bhf = jnp.zeros((1, 256), f32)
    bhf = bhf.at[:, 0:A].set(params["bm"])
    bhf = bhf.at[:, A:2 * A].set(params["bs"])
    bhf = bhf.at[:, 2 * A:2 * A + 1].set(params["bc3"])
    bslab = jnp.concatenate([b1f, b2f, bhf], axis=0)        # [3, 256]

    return wslab, bslab


# --------------------------- Pure-JAX reference -------------------------------
def _reference(obs, p):
    h = jnp.maximum(obs @ p["w1"] + p["b1"], 0.0)
    h = jnp.maximum(h @ p["w2"] + p["b2"], 0.0)
    mean = h @ p["wm"] + p["bm"]
    std = jnp.exp(jnp.clip(h @ p["ws"] + p["bs"], -20.0, 2.0))
    c = jnp.maximum(obs @ p["wc1"] + p["bc1"], 0.0)
    c = jnp.maximum(c @ p["wc2"] + p["bc2"], 0.0)
    value = (c @ p["wc3"] + p["bc3"]).reshape(-1)
    return mean, std, value


# ------------------------------------------------------------------------------
if __name__ == "__main__":
    BATCH, STATE_DIM, ACTION_DIM = 4, 32, 8

    key = jax.random.PRNGKey(0)
    k_obs, k_params = jax.random.split(key)

    obs = jax.random.normal(k_obs, (BATCH, STATE_DIM), jnp.float32)
    params = init_policy_params(k_params, STATE_DIM, ACTION_DIM)
    wslab, bslab = pack_params(params, STATE_DIM, ACTION_DIM)

    (mean, std), value = policy_net_forward(obs, wslab, bslab,
                                            action_dim=ACTION_DIM)
    jax.block_until_ready((mean, std, value))

    # correctness check vs pure-JAX reference
    mean_ref, std_ref, value_ref = _reference(obs, params)
    assert mean.shape == (BATCH, ACTION_DIM)
    assert std.shape == (BATCH, ACTION_DIM)
    assert value.shape == (BATCH,)
    assert jnp.allclose(mean, mean_ref, atol=1e-5, rtol=1e-5)
    assert jnp.allclose(std, std_ref, atol=1e-5, rtol=1e-5)
    assert jnp.allclose(value, value_ref, atol=1e-5, rtol=1e-5)
    assert bool(jnp.all(std > 0))

    print("KERNEL_OK")
</pallas_src>

<mosaic_0001>
module attributes {stable_mosaic.version = 11 : i64} {
  func.func @_policy_kernel(%arg0: i32, %arg1: memref<8x32xf32, #tpu.memory_space<vmem>>, %arg2: memref<544x256xf32, #tpu.memory_space<vmem>>, %arg3: memref<3x256xf32, #tpu.memory_space<vmem>>, %arg4: memref<8x128xf32, #tpu.memory_space<vmem>>) attributes {dimension_semantics = [#tpu.dimension_semantics<parallel>], iteration_bounds = array<i64: 1>, scalar_prefetch = 0 : i64, scratch_operands = 0 : i64, tpu.core_type = #tpu.core_type<tc>, window_params = [{transform_indices = @transform_0, window_bounds = array<i64: 8, 32>}, {pipeline_mode = #tpu.pipeline_mode<synchronous>, transform_indices = @transform_1, window_bounds = array<i64: 544, 256>}, {pipeline_mode = #tpu.pipeline_mode<synchronous>, transform_indices = @transform_2, window_bounds = array<i64: 3, 256>}, {transform_indices = @transform_3, window_bounds = array<i64: 8, 128>}]} {
    %c0 = arith.constant 0 : index
    %c0_0 = arith.constant 0 : index
    %0 = vector.load %arg1[%c0, %c0_0] : memref<8x32xf32, #tpu.memory_space<vmem>>, vector<8x32xf32>
    %c0_1 = arith.constant 0 : index
    %c0_2 = arith.constant 0 : index
    %1 = vector.load %arg2[%c0_1, %c0_2] : memref<544x256xf32, #tpu.memory_space<vmem>>, vector<32x256xf32>
    %cst = arith.constant dense<0.000000e+00> : vector<8x256xf32>
    %2 = tpu.matmul %0, %1, %cst {dimension_numbers = #tpu.dot_dimension_numbers<[1], [0], [0], [1], [0, 0, 1, 1], [], []>} : vector<8x32xf32>, vector<32x256xf32>, vector<8x256xf32> -> vector<8x256xf32>
    %c0_3 = arith.constant 0 : index
    %c0_4 = arith.constant 0 : index
    %3 = vector.load %arg3[%c0_3, %c0_4] : memref<3x256xf32, #tpu.memory_space<vmem>>, vector<1x256xf32>
    %4 = vector.broadcast %3 : vector<1x256xf32> to vector<8x256xf32>
    %5 = arith.addf %2, %4 : vector<8x256xf32>
    %cst_5 = arith.constant 0.000000e+00 : f32
    %6 = vector.broadcast %cst_5 : f32 to vector<8x256xf32>
    %7 = arith.maximumf %5, %6 : vector<8x256xf32>
    %c32 = arith.constant 32 : index
    %c0_6 = arith.constant 0 : index
    %8 = vector.load %arg2[%c32, %c0_6] : memref<544x256xf32, #tpu.memory_space<vmem>>, vector<256x256xf32>
    %cst_7 = arith.constant dense<0.000000e+00> : vector<8x256xf32>
    %9 = tpu.matmul %7, %8, %cst_7 {dimension_numbers = #tpu.dot_dimension_numbers<[1], [0], [0], [1], [0, 0, 1, 1], [], []>} : vector<8x256xf32>, vector<256x256xf32>, vector<8x256xf32> -> vector<8x256xf32>
    %c1 = arith.constant 1 : index
    %c0_8 = arith.constant 0 : index
    %10 = vector.load %arg3[%c1, %c0_8] : memref<3x256xf32, #tpu.memory_space<vmem>>, vector<1x256xf32>
    %11 = vector.broadcast %10 : vector<1x256xf32> to vector<8x256xf32>
    %12 = arith.addf %9, %11 : vector<8x256xf32>
    %cst_9 = arith.constant 0.000000e+00 : f32
    %13 = vector.broadcast %cst_9 : f32 to vector<8x256xf32>
    %14 = arith.maximumf %12, %13 : vector<8x256xf32>
    %c288 = arith.constant 288 : index
    %c0_10 = arith.constant 0 : index
    %15 = vector.load %arg2[%c288, %c0_10] : memref<544x256xf32, #tpu.memory_space<vmem>>, vector<256x128xf32>
    %cst_11 = arith.constant dense<0.000000e+00> : vector<8x128xf32>
    %16 = tpu.matmul %14, %15, %cst_11 {dimension_numbers = #tpu.dot_dimension_numbers<[1], [0], [0], [1], [0, 0, 1, 1], [], []>} : vector<8x256xf32>, vector<256x128xf32>, vector<8x128xf32> -> vector<8x128xf32>
    %c2 = arith.constant 2 : index
    %c0_12 = arith.constant 0 : index
    %17 = vector.load %arg3[%c2, %c0_12] : memref<3x256xf32, #tpu.memory_space<vmem>>, vector<1x128xf32>
    %18 = vector.broadcast %17 : vector<1x128xf32> to vector<8x128xf32>
    %19 = arith.addf %16, %18 : vector<8x128xf32>
    %20 = tpu.iota {dimensions = array<i32: 1>} : vector<8x128xi32>
    %c8_i32 = arith.constant 8 : i32
    %21 = vector.broadcast %c8_i32 : i32 to vector<8x128xi32>
    %22 = arith.cmpi sge, %20, %21 : vector<8x128xi32>
    %c16_i32 = arith.constant 16 : i32
    %23 = vector.broadcast %c16_i32 : i32 to vector<8x128xi32>
    %24 = arith.cmpi slt, %20, %23 : vector<8x128xi32>
    %25 = arith.andi %22, %24 : vector<8x128xi1>
    %cst_13 = arith.constant -2.000000e+01 : f32
    %cst_14 = arith.constant 2.000000e+00 : f32
    %26 = vector.broadcast %cst_13 : f32 to vector<8x128xf32>
    %27 = arith.maximumf %26, %19 : vector<8x128xf32>
    %28 = vector.broadcast %cst_14 : f32 to vector<8x128xf32>
    %29 = arith.minimumf %28, %27 : vector<8x128xf32>
    %30 = math.exp %29 : vector<8x128xf32>
    %31 = arith.select %25, %30, %19 : vector<8x128xi1>, vector<8x128xf32>
    %c0_15 = arith.constant 0 : index
    %c0_16 = arith.constant 0 : index
    %32 = vector.load %arg4[%c0_15, %c0_16] : memref<8x128xf32, #tpu.memory_space<vmem>>, vector<8x128xf32>
    tpu.vector_store %arg4[%c0_15, %c0_16], %31 {strides = array<i32>} : memref<8x128xf32, #tpu.memory_space<vmem>>, vector<8x128xf32>,
    return
  }
  func.func @transform_0(%arg0: i32) -> (i32, i32) {
    %c0_i32 = arith.constant 0 : i32
    %c0_i32_0 = arith.constant 0 : i32
    return %arg0, %c0_i32 : i32, i32
  }
  func.func @transform_1(%arg0: i32) -> (i32, i32) {
    %c0_i32 = arith.constant 0 : i32
    %c0_i32_0 = arith.constant 0 : i32
    %c0_i32_1 = arith.constant 0 : i32
    return %c0_i32, %c0_i32_0 : i32, i32
  }
  func.func @transform_2(%arg0: i32) -> (i32, i32) {
    %c0_i32 = arith.constant 0 : i32
    %c0_i32_0 = arith.constant 0 : i32
    %c0_i32_1 = arith.constant 0 : i32
    return %c0_i32, %c0_i32_0 : i32, i32
  }
  func.func @transform_3(%arg0: i32) -> (i32, i32) {
    %c0_i32 = arith.constant 0 : i32
    %c0_i32_0 = arith.constant 0 : i32
    return %arg0, %c0_i32 : i32, i32
  }
}

</mosaic_0001>

<llo_original>
// kernel: _forward_impl.1
$region0: #{_forward_impl.1}
  #allocation0 [shape = 'u32[]', space=smem, size = 0x4, offset = 0x4, fixed_abs, tag = 'smem constant byte address 0x4 - core index']
  #allocation1 [shape = 'u32[72,128]{1,0:T(1,128)}', space=vmem, size = 0x9000, scoped, tag = 'internal scratch']
  %s0 = inlined_call_operand.vmem [shape: f32[8,32], index: 0, kind: input, shape index: {}]
  %s1 = inlined_call_operand.hbm [shape: f32[544,256], index: 1, kind: input, shape index: {}]
  %s2 = inlined_call_operand.vmem [shape: f32[3,256], index: 2, kind: input, shape index: {}]
  %s3 = inlined_call_operand.vmem [shape: f32[8,128], index: 3, kind: output, shape index: {}]
  %s4 = sld [smem:[#allocation0]]
  $region26: #{_forward_impl.1} parent=0
    _
  %s6 = ssub.s32 1, %s4
  %s7 = scalar_select 0, %s6, %s4
  $region1: #{_forward_impl.1} parent=0
    #allocation2 [shape = 'u8[557056]{0}', space=vmem, size = 0x88000, scoped, tag = 'input window, operand 1, single buffered']
    #allocation3 [shape = 's32[1]{0}', space=sflag, size = 0x4, scoped, tag = 'scoped memory for _forward_impl.1']
    %8 = vsyncpa [#allocation3], 0
    // Predicated region
    $region2: #{_forward_impl.1} parent=1 // pred_check
      _
    $region3: #{_forward_impl.1} parent=1 // pred_check_branch
      %10 = sbr.rel (0) target = $region5
    $region4: #{_forward_impl.1} parent=1 // pred_region
      _
    $region5: #{_forward_impl.1} parent=1 // pred_fallthru
      _
    // Predicated region
    $region6: #{_forward_impl.1} parent=1 // pred_check
      _
    $region7: #{_forward_impl.1} parent=1 // pred_check_branch
      %12 = sbr.rel (0) target = $region9
    $region8: #{_forward_impl.1} parent=1 // pred_region
      %14 = vsyncadd [#allocation3], 0
      %s15 = sshll.u32 %s1, 4
      %s16 = int_to_ptr.hbm [resolvable:$true] %s15
      %s17 = sshll.u32 [#allocation2], 4
      %s18 = int_to_ptr.vmem [resolvable:$true] %s17
      %23 = dma.hbm_to_vmem [thread:$0]  %s16, 17408, %s18, [#allocation3], 256, 256, 16
    $region9: #{_forward_impl.1} parent=1 // pred_fallthru
      _
    // Predicated region
    $region10: #{_forward_impl.1} parent=1 // pred_check
      _
    $region11: #{_forward_impl.1} parent=1 // pred_check_branch
      %25 = sbr.rel (0) target = $region13
    $region12: #{_forward_impl.1} parent=1 // pred_region
      _
    $region13: #{_forward_impl.1} parent=1 // pred_fallthru
      _
    // Predicated region
    $region14: #{_forward_impl.1} parent=1 // pred_check
      _
    $region15: #{_forward_impl.1} parent=1 // pred_check_branch
      %27 = sbr.rel (0) target = $region17
    $region16: #{_forward_impl.1} parent=1 // pred_region
      %29 = dma.done [#allocation3], 17408
    $region17: #{_forward_impl.1} parent=1 // pred_fallthru
      _
    %v30 = vld [vmem:[%s0] sm:$0xff]
    %v31 = vld [vmem:[#allocation2] sm:$0xff]
    %v32 = vld [vmem:[#allocation2 + $0x8] sm:$0xff]
    %v33 = vld [vmem:[#allocation2 + $0x10] sm:$0xff]
    %v34 = vld [vmem:[#allocation2 + $0x18] sm:$0xff]
    %v35 = vld [vmem:[#allocation2 + $0x20] sm:$0xff]
    %v36 = vld [vmem:[#allocation2 + $0x28] sm:$0xff]
    %v37 = vld [vmem:[#allocation2 + $0x30] sm:$0xff]
    %v38 = vld [vmem:[#allocation2 + $0x38] sm:$0xff]
    %v39 = vld [vmem:[%s2] ss:$4 sm:$0x3]
    %v41 = vperm.slane %v39, 0
    %v42 = vperm.slane %v39, 1
    %vm45 = vcmask 261120
    %v47 = vsel %vm45, %v30, 0
    %49 = vmatpush.msra.mxu0 0.0
    %50 = vmatpush.msra.mxu0 0.0
    %51 = vmatpush.msra.mxu0 0.0
    %52 = vmatpush.msra.mxu0 0.0
    %53 = vmatpush.msra.mxu0 0.0
    %54 = vmatpush.msra.mxu0 0.0
    %55 = vmatpush.msra.mxu0 0.0
    %56 = vmatpush.msra.mxu0 0.0
    %57 = vmatpush.msra.mxu0 0.0
    %58 = vmatpush.msra.mxu0 0.0
    %59 = vmatpush.msra.mxu0 0.0
    %60 = vmatpush.msra.mxu0 0.0
    %61 = vmatpush.msra.mxu0 %v37
    %62 = vmatpush.msra.mxu0 %v35
    %63 = vmatpush.msra.mxu0 %v33
    %64 = vmatpush.msra.mxu0 %v31
    %65 = vmatmul.f32.gmra.mxu0 %v47
    %v66 = vpop.f32.mrf.mxu0
    %v67 = vadd.f32 %v41, %v66
    %68 = vdwg.mxu0
    %69 = vmatpush.msra.mxu0 0.0
    %70 = vmatpush.msra.mxu0 0.0
    %71 = vmatpush.msra.mxu0 0.0
    %72 = vmatpush.msra.mxu0 0.0
    %73 = vmatpush.msra.mxu0 0.0
    %74 = vmatpush.msra.mxu0 0.0
    %75 = vmatpush.msra.mxu0 0.0
    %76 = vmatpush.msra.mxu0 0.0
    %77 = vmatpush.msra.mxu0 0.0
    %78 = vmatpush.msra.mxu0 0.0
    %79 = vmatpush.msra.mxu0 0.0
    %80 = vmatpush.msra.mxu0 0.0
    %81 = vmatpush.msra.mxu0 %v38
    %82 = vmatpush.msra.mxu0 %v36
    %83 = vmatpush.msra.mxu0 %v34
    %84 = vmatpush.msra.mxu0 %v32
    %85 = vmatmul.f32.gmra.mxu0 %v47
    %v86 = vpop.f32.mrf.mxu0
    %v87 = vadd.f32 %v42, %v86
    %88 = vdwg.mxu0
    %v89 = vmax.f32 %v67, 0.0
    %v90 = vmax.f32 %v87, 0.0
    %v91 = vld [vmem:[#allocation2 + $0x40] sm:$0xff]
    %v92 = vld [vmem:[#allocation2 + $0x48] sm:$0xff]
    %v93 = vld [vmem:[#allocation2 + $0x50] sm:$0xff]
    %v94 = vld [vmem:[#allocation2 + $0x58] sm:$0xff]
    %v95 = vld [vmem:[#allocation2 + $0x60] sm:$0xff]
    %v96 = vld [vmem:[#allocation2 + $0x68] sm:$0xff]
    %v97 = vld [vmem:[#allocation2 + $0x70] sm:$0xff]
    %v98 = vld [vmem:[#allocation2 + $0x78] sm:$0xff]
    %v99 = vld [vmem:[#allocation2 + $0x80] sm:$0xff]
    %v100 = vld [vmem:[#allocation2 + $0x88] sm:$0xff]
    %v101 = vld [vmem:[#allocation2 + $0x90] sm:$0xff]
    %v102 = vld [vmem:[#allocation2 + $0x98] sm:$0xff]
    %v103 = vld [vmem:[#allocation2 + $0xa0] sm:$0xff]
    %v104 = vld [vmem:[#allocation2 + $0xa8] sm:$0xff]
    %v105 = vld [vmem:[#allocation2 + $0xb0] sm:$0xff]
    %v106 = vld [vmem:[#allocation2 + $0xb8] sm:$0xff]
    %v107 = vld [vmem:[#allocation2 + $0xc0] sm:$0xff]
    %v108 = vld [vmem:[#allocation2 + $0xc8] sm:$0xff]
    %v109 = vld [vmem:[#allocation2 + $0xd0] sm:$0xff]
    %v110 = vld [vmem:[#allocation2 + $0xd8] sm:$0xff]
    %v111 = vld [vmem:[#allocation2 + $0xe0] sm:$0xff]
    %v112 = vld [vmem:[#allocation2 + $0xe8] sm:$0xff]
    %v113 = vld [vmem:[#allocation2 + $0xf0] sm:$0xff]
    %v114 = vld [vmem:[#allocation2 + $0xf8] sm:$0xff]
    %v115 = vld [vmem:[#allocation2 + $0x100] sm:$0xff]
    %v116 = vld [vmem:[#allocation2 + $0x108] sm:$0xff]
    %v117 = vld [vmem:[#allocation2 + $0x110] sm:$0xff]
    %v118 = vld [vmem:[#allocation2 + $0x118] sm:$0xff]
    %v119 = vld [vmem:[#allocation2 + $0x120] sm:$0xff]
    %v120 = vld [vmem:[#allocation2 + $0x128] sm:$0xff]
    %v121 = vld [vmem:[#allocation2 + $0x130] sm:$0xff]
    %v122 = vld [vmem:[#allocation2 + $0x138] sm:$0xff]
    %v123 = vld [vmem:[#allocation2 + $0x140] sm:$0xff]
    %v124 = vld [vmem:[#allocation2 + $0x148] sm:$0xff]
    %v125 = vld [vmem:[#allocation2 + $0x150] sm:$0xff]
    %v126 = vld [vmem:[#allocation2 + $0x158] sm:$0xff]
    %v127 = vld [vmem:[#allocation2 + $0x160] sm:$0xff]
    %v128 = vld [vmem:[#allocation2 + $0x168] sm:$0xff]
    %v129 = vld [vmem:[#allocation2 + $0x170] sm:$0xff]
    %v130 = vld [vmem:[#allocation2 + $0x178] sm:$0xff]
    %v131 = vld [vmem:[#allocation2 + $0x180] sm:$0xff]
    %v132 = vld [vmem:[#allocation2 + $0x188] sm:$0xff]
    %v133 = vld [vmem:[#allocation2 + $0x190] sm:$0xff]
    %v134 = vld [vmem:[#allocation2 + $0x198] sm:$0xff]
    %v135 = vld [vmem:[#allocation2 + $0x1a0] sm:$0xff]
    %v136 = vld [vmem:[#allocation2 + $0x1a8] sm:$0xff]
    %v137 = vld [vmem:[#allocation2 + $0x1b0] sm:$0xff]
    %v138 = vld [vmem:[#allocation2 + $0x1b8] sm:$0xff]
    %v139 = vld [vmem:[#allocation2 + $0x1c0] sm:$0xff]
    %v140 = vld [vmem:[#allocation2 + $0x1c8] sm:$0xff]
    %v141 = vld [vmem:[#allocation2 + $0x1d0] sm:$0xff]
    %v142 = vld [vmem:[#allocation2 + $0x1d8] sm:$0xff]
    %v143 = vld [vmem:[#allocation2 + $0x1e0] sm:$0xff]
    %v144 = vld [vmem:[#allocation2 + $0x1e8] sm:$0xff]
    %v145 = vld [vmem:[#allocation2 + $0x1f0] sm:$0xff]
    %v146 = vld [vmem:[#allocation2 + $0x1f8] sm:$0xff]
    %v147 = vld [vmem:[#allocation2 + $0x200] sm:$0xff]
    %v148 = vld [vmem:[#allocation2 + $0x208] sm:$0xff]
    %v149 = vld [vmem:[#allocation2 + $0x210] sm:$0xff]
    %v150 = vld [vmem:[#allocation2 + $0x218] sm:$0xff]
    %v151 = vld [vmem:[#allocation2 + $0x220] sm:$0xff]
    %v152 = vld [vmem:[#allocation2 + $0x228] sm:$0xff]
    %v153 = vld [vmem:[#allocation2 + $0x230] sm:$0xff]
    %v154 = vld [vmem:[#allocation2 + $0x238] sm:$0xff]
    %s155 = scalar_lea.vmem %s2, 1
    %v156 = vld [vmem:[%s155] ss:$4 sm:$0x3]
    %v158 = vperm.slane %v156, 0
    %v159 = vperm.slane %v156, 1
    %162 = vmatpush.msra.mxu0 %v121
    %163 = vmatpush.msra.mxu0 %v119
    %164 = vmatpush.msra.mxu0 %v117
    %165 = vmatpush.msra.mxu0 %v115
    %166 = vmatpush.msra.mxu0 %v113
    %167 = vmatpush.msra.mxu0 %v111
    %168 = vmatpush.msra.mxu0 %v109
    %169 = vmatpush.msra.mxu0 %v107
    %170 = vmatpush.msra.mxu0 %v105
    %171 = vmatpush.msra.mxu0 %v103
    %172 = vmatpush.msra.mxu0 %v101
    %173 = vmatpush.msra.mxu0 %v99
    %174 = vmatpush.msra.mxu0 %v97
    %175 = vmatpush.msra.mxu0 %v95
    %176 = vmatpush.msra.mxu0 %v93
    %177 = vmatpush.msra.mxu0 %v91
    %178 = vmatmul.f32.gmra.mxu0 %v89
    %v179 = vpop.f32.mrf.mxu0
    %v180 = vadd.f32 %v158, %v179
    %181 = vdwg.mxu0
    %182 = vmatpush.msra.mxu0 %v153
    %183 = vmatpush.msra.mxu0 %v151
    %184 = vmatpush.msra.mxu0 %v149
    %185 = vmatpush.msra.mxu0 %v147
    %186 = vmatpush.msra.mxu0 %v145
    %187 = vmatpush.msra.mxu0 %v143
    %188 = vmatpush.msra.mxu0 %v141
    %189 = vmatpush.msra.mxu0 %v139
    %190 = vmatpush.msra.mxu0 %v137
    %191 = vmatpush.msra.mxu0 %v135
    %192 = vmatpush.msra.mxu0 %v133
    %193 = vmatpush.msra.mxu0 %v131
    %194 = vmatpush.msra.mxu0 %v129
    %195 = vmatpush.msra.mxu0 %v127
    %196 = vmatpush.msra.mxu0 %v125
    %197 = vmatpush.msra.mxu0 %v123
    %198 = vmatmul.f32.gmra.mxu0 %v90
    %v199 = vpop.f32.mrf.mxu0
    %v200 = vadd.f32 %v180, %v199
    %201 = vdwg.mxu0
    %202 = vmatpush.msra.mxu0 %v122
    %203 = vmatpush.msra.mxu0 %v120
    %204 = vmatpush.msra.mxu0 %v118
    %205 = vmatpush.msra.mxu0 %v116
    %206 = vmatpush.msra.mxu0 %v114
    %207 = vmatpush.msra.mxu0 %v112
    %208 = vmatpush.msra.mxu0 %v110
    %209 = vmatpush.msra.mxu0 %v108
    %210 = vmatpush.msra.mxu0 %v106
    %211 = vmatpush.msra.mxu0 %v104
    %212 = vmatpush.msra.mxu0 %v102
    %213 = vmatpush.msra.mxu0 %v100
    %214 = vmatpush.msra.mxu0 %v98
    %215 = vmatpush.msra.mxu0 %v96
    %216 = vmatpush.msra.mxu0 %v94
    %217 = vmatpush.msra.mxu0 %v92
    %218 = vmatmul.f32.gmra.mxu0 %v89
    %v219 = vpop.f32.mrf.mxu0
    %v220 = vadd.f32 %v159, %v219
    %221 = vdwg.mxu0
    %222 = vmatpush.msra.mxu0 %v154
    %223 = vmatpush.msra.mxu0 %v152
    %224 = vmatpush.msra.mxu0 %v150
    %225 = vmatpush.msra.mxu0 %v148
    %226 = vmatpush.msra.mxu0 %v146
    %227 = vmatpush.msra.mxu0 %v144
    %228 = vmatpush.msra.mxu0 %v142
    %229 = vmatpush.msra.mxu0 %v140
    %230 = vmatpush.msra.mxu0 %v138
    %231 = vmatpush.msra.mxu0 %v136
    %232 = vmatpush.msra.mxu0 %v134
    %233 = vmatpush.msra.mxu0 %v132
    %234 = vmatpush.msra.mxu0 %v130
    %235 = vmatpush.msra.mxu0 %v128
    %236 = vmatpush.msra.mxu0 %v126
    %237 = vmatpush.msra.mxu0 %v124
    %238 = vmatmul.f32.gmra.mxu0 %v90
    %v239 = vpop.f32.mrf.mxu0
    %v240 = vadd.f32 %v220, %v239
    %241 = vdwg.mxu0
    %v242 = vmax.f32 %v200, 0.0
    %v243 = vmax.f32 %v240, 0.0
    %v244 = vld [vmem:[#allocation2 + $0x240] sm:$0xff]
    %v245 = vld [vmem:[#allocation2 + $0x250] sm:$0xff]
    %v246 = vld [vmem:[#allocation2 + $0x260] sm:$0xff]
    %v247 = vld [vmem:[#allocation2 + $0x270] sm:$0xff]
    %v248 = vld [vmem:[#allocation2 + $0x280] sm:$0xff]
    %v249 = vld [vmem:[#allocation2 + $0x290] sm:$0xff]
    %v250 = vld [vmem:[#allocation2 + $0x2a0] sm:$0xff]
    %v251 = vld [vmem:[#allocation2 + $0x2b0] sm:$0xff]
    %v252 = vld [vmem:[#allocation2 + $0x2c0] sm:$0xff]
    %v253 = vld [vmem:[#allocation2 + $0x2d0] sm:$0xff]
    %v254 = vld [vmem:[#allocation2 + $0x2e0] sm:$0xff]
    %v255 = vld [vmem:[#allocation2 + $0x2f0] sm:$0xff]
    %v256 = vld [vmem:[#allocation2 + $0x300] sm:$0xff]
    %v257 = vld [vmem:[#allocation2 + $0x310] sm:$0xff]
    %v258 = vld [vmem:[#allocation2 + $0x320] sm:$0xff]
    %v259 = vld [vmem:[#allocation2 + $0x330] sm:$0xff]
    %v260 = vld [vmem:[#allocation2 + $0x340] sm:$0xff]
    %v261 = vld [vmem:[#allocation2 + $0x350] sm:$0xff]
    %v262 = vld [vmem:[#allocation2 + $0x360] sm:$0xff]
    %v263 = vld [vmem:[#allocation2 + $0x370] sm:$0xff]
    %v264 = vld [vmem:[#allocation2 + $0x380] sm:$0xff]
    %v265 = vld [vmem:[#allocation2 + $0x390] sm:$0xff]
    %v266 = vld [vmem:[#allocation2 + $0x3a0] sm:$0xff]
    %v267 = vld [vmem:[#allocation2 + $0x3b0] sm:$0xff]
    %v268 = vld [vmem:[#allocation2 + $0x3c0] sm:$0xff]
    %v269 = vld [vmem:[#allocation2 + $0x3d0] sm:$0xff]
    %v270 = vld [vmem:[#allocation2 + $0x3e0] sm:$0xff]
    %v271 = vld [vmem:[#allocation2 + $0x3f0] sm:$0xff]
    %v272 = vld [vmem:[#allocation2 + $0x400] sm:$0xff]
    %v273 = vld [vmem:[#allocation2 + $0x410] sm:$0xff]
    %v274 = vld [vmem:[#allocation2 + $0x420] sm:$0xff]
    %v275 = vld [vmem:[#allocation2 + $0x430] sm:$0xff]
    %v276 = vld [vmem:[%s2 + $0x2] sm:$0x1]
    %v277 = vperm.slane %v276, 0
    %278 = vmatpush.msra.mxu0 %v259
    %279 = vmatpush.msra.mxu0 %v258
    %280 = vmatpush.msra.mxu0 %v257
    %281 = vmatpush.msra.mxu0 %v256
    %282 = vmatpush.msra.mxu0 %v255
    %283 = vmatpush.msra.mxu0 %v254
    %284 = vmatpush.msra.mxu0 %v253
    %285 = vmatpush.msra.mxu0 %v252
    %286 = vmatpush.msra.mxu0 %v251
    %287 = vmatpush.msra.mxu0 %v250
    %288 = vmatpush.msra.mxu0 %v249
    %289 = vmatpush.msra.mxu0 %v248
    %290 = vmatpush.msra.mxu0 %v247
    %291 = vmatpush.msra.mxu0 %v246
    %292 = vmatpush.msra.mxu0 %v245
    %293 = vmatpush.msra.mxu0 %v244
    %294 = vmatmul.f32.gmra.mxu0 %v242
    %v295 = vpop.f32.mrf.mxu0
    %v296 = vadd.f32 %v277, %v295
    %297 = vdwg.mxu0
    %298 = vmatpush.msra.mxu0 %v275
    %299 = vmatpush.msra.mxu0 %v274
    %300 = vmatpush.msra.mxu0 %v273
    %301 = vmatpush.msra.mxu0 %v272
    %302 = vmatpush.msra.mxu0 %v271
    %303 = vmatpush.msra.mxu0 %v270
    %304 = vmatpush.msra.mxu0 %v269
    %305 = vmatpush.msra.mxu0 %v268
    %306 = vmatpush.msra.mxu0 %v267
    %307 = vmatpush.msra.mxu0 %v266
    %308 = vmatpush.msra.mxu0 %v265
    %309 = vmatpush.msra.mxu0 %v264
    %310 = vmatpush.msra.mxu0 %v263
    %311 = vmatpush.msra.mxu0 %v262
    %312 = vmatpush.msra.mxu0 %v261
    %313 = vmatpush.msra.mxu0 %v260
    %314 = vmatmul.f32.gmra.mxu0 %v243
    %v315 = vpop.f32.mrf.mxu0
    %v316 = vadd.f32 %v296, %v315
    %317 = vdwg.mxu0
    %v318 = vlaneseq
    %v319 = vand.u32 %v318, 127
    %vm320 = vcmp.ge.s32.totalorder %v319, 8
    %vm321 = vcmp.lt.s32.totalorder %v319, 16
    %vm322 = vmand %vm320, %vm321
    %v323 = vmax.f32 %v316, -20.0
    %v324 = vmin.f32 %v323, 2.0
    %v325 = vmul.f32 %v324, 1.442695
    %v326 = vpow.pop %v325
    %v327 = vsel %vm322, %v326, %v316
    %328 = vst [vmem:[%s3] sm:$0xff] %v327
    // Predicated region
    $region18: #{_forward_impl.1} parent=1 // pred_check
      _
    $region19: #{_forward_impl.1} parent=1 // pred_check_branch
      %330 = sbr.rel (0) target = $region21
    $region20: #{_forward_impl.1} parent=1 // pred_region
      _
    $region21: #{_forward_impl.1} parent=1 // pred_fallthru
      _
    // Predicated region
    $region22: #{_forward_impl.1} parent=1 // pred_check
      _
    $region23: #{_forward_impl.1} parent=1 // pred_check_branch
      %332 = sbr.rel (0) target = $region25
    $region24: #{_forward_impl.1} parent=1 // pred_region
      _
    $region25: #{_forward_impl.1} parent=1 // pred_fallthru
      _
    %333 = vsyncpa [#allocation3], 1

</llo_original>
